<compile_context>
chip_gen: v5e
topology: v5e:2x2
jax: 0.10.0
libtpu: 0.0.40
codegen_flags: <defaults>
</compile_context>

<pallas_src>
import numpy as np
import jax
import jax.numpy as jnp
from jax.experimental import pallas as pl
from jax.experimental.pallas import tpu as pltpu


def _round_up(x: int, m: int) -> int:
    return (x + m - 1) // m * m


def _fsq_constants(levels) -> np.ndarray:
    """Per-channel constants, one row each: shift, half_l, offset, 1/half_width,
    half_width, basis.  Shape (6, C), float32."""
    lv = np.asarray(levels, dtype=np.float64)
    eps = 1e-3
    half_l = (lv - 1.0) * (1.0 + eps) / 2.0
    offset = np.where(lv % 2 == 0, 0.5, 0.0)
    shift = np.arctanh(offset / half_l)
    half_w = np.floor(lv / 2.0)                      # levels // 2
    inv_hw = 1.0 / half_w
    basis = np.cumprod(np.concatenate(([1.0], lv[:-1])))
    return np.stack([shift, half_l, offset, inv_hw, half_w, basis]).astype(np.float32)


def _make_fsq_kernel(tile_m: int, c: int):
    rows = tile_m // 128

    def kernel(z_ref, w_in_ref, b_in_ref, w_out_ref, b_out_ref, k_ref,
               out_ref, codes_ref, idx_ref):
        # Per-channel constants (VMEM-resident, loaded once per step as (1, C)).
        shift = k_ref[0:1, :]
        half_l = k_ref[1:2, :]
        offset = k_ref[2:3, :]
        inv_hw = k_ref[3:4, :]
        half_w = k_ref[4:5, :]
        basis = k_ref[5:6, :]

        z = z_ref[...].astype(jnp.float32)

        # project_in: (TILE_M, D) @ (D, C).  Skinny on the MXU but hidden under DMA.
        zc = jnp.dot(z, w_in_ref[...].astype(jnp.float32),
                     preferred_element_type=jnp.float32)
        zc = zc + b_in_ref[...].astype(jnp.float32)

        # bound(): tanh on the EUP; all divisions pre-folded into constants.
        bounded = jnp.tanh(zc + shift) * half_l - offset
        quant = jnp.round(bounded)                  # round-half-to-even == torch.round
        codes = quant * inv_hw                      # quant / half_width
        codes_ref[...] = codes.astype(codes_ref.dtype)

        # codes_to_indices: zhat = quant + half_width in [0, L-1];
        # index = sum_c zhat[c] * basis[c].  Reinterpret the row-tile as
        # (rows, 128, C) -- this only splits the sublane-major dim, so the vreg
        # layout is unchanged -- and reduce over the minor axis so the result
        # lands lane-dense as (rows, 128).
        zhat = quant + half_w
        zhat3 = zhat.reshape(rows, 128, c)
        idx = jnp.sum(zhat3 * basis.reshape(1, 1, c), axis=-1)   # (rows, 128) f32
        idx_ref[0] = idx.astype(jnp.int32)   # exact: codebook_size < 2**24

        # project_out: (TILE_M, C) @ (C, D) -- the lane-dense matmul.
        out = jnp.dot(codes, w_out_ref[...].astype(jnp.float32),
                      preferred_element_type=jnp.float32)
        out_ref[...] = (out + b_out_ref[...].astype(jnp.float32)).astype(out_ref.dtype)

    return kernel


def fsq_forward(z, w_in, b_in, w_out, b_out, levels, *, tile_m: int = 1024):
    """Fused FSQ forward.  z: (..., D).  Returns (out, codes, indices)."""
    levels = tuple(int(l) for l in levels)
    assert all(l >= 2 for l in levels)
    c = len(levels)
    d = z.shape[-1]
    assert w_in.shape == (d, c) and b_in.shape == (c,)
    assert w_out.shape == (c, d) and b_out.shape == (d,)
    codebook_size = int(np.prod(levels))
    assert codebook_size < 2 ** 24, "f32 basis reduction needs prod(levels) < 2**24"

    lead_shape = z.shape[:-1]
    m = int(np.prod(lead_shape))
    z2 = z.reshape(m, d)

    # Row tile: multiple of 128, as large as requested but no bigger than needed.
    tile_m = max(128, min(int(tile_m), _round_up(m, 128)))
    tile_m = (tile_m // 128) * 128
    m_pad = _round_up(m, tile_m)
    if m_pad != m:
        z2 = jnp.pad(z2, ((0, m_pad - m), (0, 0)))
    g = m_pad // tile_m
    rows = tile_m // 128

    consts = jnp.asarray(_fsq_constants(levels))        # (6, C) f32
    b_in2 = b_in.reshape(1, c)
    b_out2 = b_out.reshape(1, d)

    kernel = _make_fsq_kernel(tile_m, c)

    grid_spec = pltpu.PrefetchScalarGridSpec(
        num_scalar_prefetch=0,
        grid=(g,),
        in_specs=[
            pl.BlockSpec((tile_m, d), lambda i: (i, 0)),      # z tile (streamed)
            pl.BlockSpec((d, c), lambda i: (0, 0)),           # W_in   (VMEM-resident)
            pl.BlockSpec((1, c), lambda i: (0, 0)),           # b_in
            pl.BlockSpec((c, d), lambda i: (0, 0)),           # W_out
            pl.BlockSpec((1, d), lambda i: (0, 0)),           # b_out
            pl.BlockSpec((6, c), lambda i: (0, 0)),           # FSQ constants
        ],
        out_specs=[
            pl.BlockSpec((tile_m, d), lambda i: (i, 0)),          # out
            pl.BlockSpec((tile_m, c), lambda i: (i, 0)),          # codes
            pl.BlockSpec((1, rows, 128), lambda i: (i, 0, 0)),    # indices slab
        ],
    )

    out_shape = (
        jax.ShapeDtypeStruct((m_pad, d), z.dtype),
        jax.ShapeDtypeStruct((m_pad, c), z.dtype),
        jax.ShapeDtypeStruct((g, rows, 128), jnp.int32),
    )

    # Conservative VMEM budget: double-buffered streams + resident weights,
    # capped well under v7x's 64 MiB physical VMEM.
    per_step = 4 * tile_m * (2 * d + c) + 4 * rows * 128
    resident = 4 * (2 * d * c + d + c + 6 * c)
    vmem_limit = int(min(max(4 * per_step + resident + (1 << 20), 8 << 20), 48 << 20))

    out, codes, idx = pl.pallas_call(
        kernel,
        out_shape=out_shape,
        grid_spec=grid_spec,
        compiler_params=pltpu.CompilerParams(
            dimension_semantics=("parallel",),
            vmem_limit_bytes=vmem_limit,
        ),
    )(z2, w_in, b_in2, w_out, b_out2, consts)

    out = out[:m].reshape(lead_shape + (d,))
    codes = codes[:m].reshape(lead_shape + (c,))
    indices = idx.reshape(m_pad)[:m].reshape(lead_shape)
    return out, codes, indices


def fsq_forward_reference(z, w_in, b_in, w_out, b_out, levels):
    """Pure numpy (float64) reference mirroring the PyTorch FSQ.forward."""
    z = np.asarray(z, np.float64)
    w_in = np.asarray(w_in, np.float64)
    b_in = np.asarray(b_in, np.float64)
    w_out = np.asarray(w_out, np.float64)
    b_out = np.asarray(b_out, np.float64)
    lv = np.asarray(levels, np.float64)
    eps = 1e-3
    half_l = (lv - 1.0) * (1.0 + eps) / 2.0
    offset = np.where(lv % 2 == 0, 0.5, 0.0)
    shift = np.arctanh(offset / half_l)
    half_w = np.floor(lv / 2.0)
    basis = np.cumprod(np.concatenate(([1.0], lv[:-1])))

    zc = z @ w_in + b_in
    bounded = np.tanh(zc + shift) * half_l - offset
    quant = np.round(bounded)
    codes = quant / half_w
    idx = ((quant + half_w) * basis).sum(-1).astype(np.int64)
    out = codes @ w_out + b_out
    return out, codes, idx


if __name__ == "__main__":
    # Small, deterministic example: batch=2, seq=8, hidden dim=32,
    # levels=[8,5,5,5] (codebook_dim=4, codebook_size=1000, num_codebooks=1).
    levels = [8, 5, 5, 5]
    B, N, D = 2, 8, 32
    C = len(levels)

    key = jax.random.PRNGKey(0)
    k1, k2, k3, k4, k5 = jax.random.split(key, 5)
    z = jax.random.normal(k1, (B, N, D), jnp.float32)
    w_in = jax.random.normal(k2, (D, C), jnp.float32) / np.sqrt(D)
    b_in = 0.1 * jax.random.normal(k3, (C,), jnp.float32)
    w_out = jax.random.normal(k4, (C, D), jnp.float32) / np.sqrt(C)
    b_out = 0.1 * jax.random.normal(k5, (D,), jnp.float32)

    out, codes, indices = fsq_forward(z, w_in, b_in, w_out, b_out, levels)
    (out, codes, indices) = jax.block_until_ready((out, codes, indices))

    out_ref, codes_ref, idx_ref = fsq_forward_reference(z, w_in, b_in, w_out, b_out, levels)
    np.testing.assert_allclose(np.asarray(out), out_ref, rtol=1e-4, atol=1e-4)
    np.testing.assert_allclose(np.asarray(codes), codes_ref, rtol=1e-4, atol=1e-4)
    np.testing.assert_array_equal(np.asarray(indices), idx_ref.astype(np.int32))
    assert indices.shape == (B, N) and out.shape == (B, N, D) and codes.shape == (B, N, C)

    print("KERNEL_OK")
</pallas_src>

<mosaic_0001>
module attributes {stable_mosaic.version = 11 : i64} {
  func.func @kernel(%arg0: i32, %arg1: memref<128x32xf32, #tpu.memory_space<vmem>>, %arg2: memref<32x4xf32, #tpu.memory_space<vmem>>, %arg3: memref<1x4xf32, #tpu.memory_space<vmem>>, %arg4: memref<4x32xf32, #tpu.memory_space<vmem>>, %arg5: memref<1x32xf32, #tpu.memory_space<vmem>>, %arg6: memref<6x4xf32, #tpu.memory_space<vmem>>, %arg7: memref<128x32xf32, #tpu.memory_space<vmem>>, %arg8: memref<128x4xf32, #tpu.memory_space<vmem>>, %arg9: memref<1x1x128xi32, #tpu.memory_space<vmem>>) attributes {dimension_semantics = [#tpu.dimension_semantics<parallel>], iteration_bounds = array<i64: 1>, scalar_prefetch = 0 : i64, scratch_operands = 0 : i64, tpu.core_type = #tpu.core_type<tc>, window_params = [{transform_indices = @transform_0, window_bounds = array<i64: 128, 32>}, {pipeline_mode = #tpu.pipeline_mode<synchronous>, transform_indices = @transform_1, window_bounds = array<i64: 32, 4>}, {pipeline_mode = #tpu.pipeline_mode<synchronous>, transform_indices = @transform_2, window_bounds = array<i64: 1, 4>}, {pipeline_mode = #tpu.pipeline_mode<synchronous>, transform_indices = @transform_3, window_bounds = array<i64: 4, 32>}, {pipeline_mode = #tpu.pipeline_mode<synchronous>, transform_indices = @transform_4, window_bounds = array<i64: 1, 32>}, {pipeline_mode = #tpu.pipeline_mode<synchronous>, transform_indices = @transform_5, window_bounds = array<i64: 6, 4>}, {transform_indices = @transform_6, window_bounds = array<i64: 128, 32>}, {transform_indices = @transform_7, window_bounds = array<i64: 128, 4>}, {transform_indices = @transform_8, window_bounds = array<i64: 1, 1, 128>}]} {
    %c0 = arith.constant 0 : index
    %c0_0 = arith.constant 0 : index
    %0 = vector.load %arg6[%c0, %c0_0] : memref<6x4xf32, #tpu.memory_space<vmem>>, vector<1x4xf32>
    %c1 = arith.constant 1 : index
    %c0_1 = arith.constant 0 : index
    %1 = vector.load %arg6[%c1, %c0_1] : memref<6x4xf32, #tpu.memory_space<vmem>>, vector<1x4xf32>
    %c2 = arith.constant 2 : index
    %c0_2 = arith.constant 0 : index
    %2 = vector.load %arg6[%c2, %c0_2] : memref<6x4xf32, #tpu.memory_space<vmem>>, vector<1x4xf32>
    %c3 = arith.constant 3 : index
    %c0_3 = arith.constant 0 : index
    %3 = vector.load %arg6[%c3, %c0_3] : memref<6x4xf32, #tpu.memory_space<vmem>>, vector<1x4xf32>
    %c4 = arith.constant 4 : index
    %c0_4 = arith.constant 0 : index
    %4 = vector.load %arg6[%c4, %c0_4] : memref<6x4xf32, #tpu.memory_space<vmem>>, vector<1x4xf32>
    %c5 = arith.constant 5 : index
    %c0_5 = arith.constant 0 : index
    %5 = vector.load %arg6[%c5, %c0_5] : memref<6x4xf32, #tpu.memory_space<vmem>>, vector<1x4xf32>
    %c0_6 = arith.constant 0 : index
    %c0_7 = arith.constant 0 : index
    %6 = vector.load %arg1[%c0_6, %c0_7] : memref<128x32xf32, #tpu.memory_space<vmem>>, vector<128x32xf32>
    %c0_8 = arith.constant 0 : index
    %c0_9 = arith.constant 0 : index
    %7 = vector.load %arg2[%c0_8, %c0_9] : memref<32x4xf32, #tpu.memory_space<vmem>>, vector<32x4xf32>
    %cst = arith.constant dense<0.000000e+00> : vector<128x4xf32>
    %8 = tpu.matmul %6, %7, %cst {dimension_numbers = #tpu.dot_dimension_numbers<[1], [0], [0], [1], [0, 0, 1, 1], [], []>} : vector<128x32xf32>, vector<32x4xf32>, vector<128x4xf32> -> vector<128x4xf32>
    %c0_10 = arith.constant 0 : index
    %c0_11 = arith.constant 0 : index
    %9 = vector.load %arg3[%c0_10, %c0_11] : memref<1x4xf32, #tpu.memory_space<vmem>>, vector<1x4xf32>
    %10 = vector.broadcast %9 : vector<1x4xf32> to vector<128x4xf32>
    %11 = arith.addf %8, %10 : vector<128x4xf32>
    %12 = vector.broadcast %0 : vector<1x4xf32> to vector<128x4xf32>
    %13 = arith.addf %11, %12 : vector<128x4xf32>
    %14 = math.tanh %13 : vector<128x4xf32>
    %15 = vector.broadcast %1 : vector<1x4xf32> to vector<128x4xf32>
    %16 = arith.mulf %14, %15 : vector<128x4xf32>
    %17 = vector.broadcast %2 : vector<1x4xf32> to vector<128x4xf32>
    %18 = arith.subf %16, %17 : vector<128x4xf32>
    %19 = math.roundeven %18 : vector<128x4xf32>
    %20 = vector.broadcast %3 : vector<1x4xf32> to vector<128x4xf32>
    %21 = arith.mulf %19, %20 : vector<128x4xf32>
    %c0_12 = arith.constant 0 : index
    %c0_13 = arith.constant 0 : index
    %22 = vector.load %arg8[%c0_12, %c0_13] : memref<128x4xf32, #tpu.memory_space<vmem>>, vector<128x4xf32>
    tpu.vector_store %arg8[%c0_12, %c0_13], %21 {strides = array<i32>} : memref<128x4xf32, #tpu.memory_space<vmem>>, vector<128x4xf32>,
    %23 = vector.broadcast %4 : vector<1x4xf32> to vector<128x4xf32>
    %24 = arith.addf %19, %23 : vector<128x4xf32>
    %25 = vector.shape_cast %24 : vector<128x4xf32> to vector<1x128x4xf32>
    %26 = vector.shape_cast %5 : vector<1x4xf32> to vector<1x1x4xf32>
    %27 = vector.broadcast %26 : vector<1x1x4xf32> to vector<1x128x4xf32>
    %28 = arith.mulf %25, %27 : vector<1x128x4xf32>
    %cst_14 = arith.constant dense<0.000000e+00> : vector<1x128xf32>
    %29 = vector.multi_reduction <add>, %28, %cst_14 [2] : vector<1x128x4xf32> to vector<1x128xf32>
    %30 = arith.fptosi %29 : vector<1x128xf32> to vector<1x128xi32>
    %c0_15 = arith.constant 0 : index
    %c0_16 = arith.constant 0 : index
    %c0_17 = arith.constant 0 : index
    %31 = vector.load %arg9[%c0_15, %c0_16, %c0_17] : memref<1x1x128xi32, #tpu.memory_space<vmem>>, vector<1x1x128xi32>
    %32 = vector.shape_cast %31 : vector<1x1x128xi32> to vector<1x128xi32>
    %33 = vector.shape_cast %30 : vector<1x128xi32> to vector<1x1x128xi32>
    tpu.vector_store %arg9[%c0_15, %c0_16, %c0_17], %33 {strides = array<i32>} : memref<1x1x128xi32, #tpu.memory_space<vmem>>, vector<1x1x128xi32>,
    %c0_18 = arith.constant 0 : index
    %c0_19 = arith.constant 0 : index
    %34 = vector.load %arg4[%c0_18, %c0_19] : memref<4x32xf32, #tpu.memory_space<vmem>>, vector<4x32xf32>
    %cst_20 = arith.constant dense<0.000000e+00> : vector<128x32xf32>
    %35 = tpu.matmul %21, %34, %cst_20 {dimension_numbers = #tpu.dot_dimension_numbers<[1], [0], [0], [1], [0, 0, 1, 1], [], []>} : vector<128x4xf32>, vector<4x32xf32>, vector<128x32xf32> -> vector<128x32xf32>
    %c0_21 = arith.constant 0 : index
    %c0_22 = arith.constant 0 : index
    %36 = vector.load %arg5[%c0_21, %c0_22] : memref<1x32xf32, #tpu.memory_space<vmem>>, vector<1x32xf32>
    %37 = vector.broadcast %36 : vector<1x32xf32> to vector<128x32xf32>
    %38 = arith.addf %35, %37 : vector<128x32xf32>
    %c0_23 = arith.constant 0 : index
    %c0_24 = arith.constant 0 : index
    %39 = vector.load %arg7[%c0_23, %c0_24] : memref<128x32xf32, #tpu.memory_space<vmem>>, vector<128x32xf32>
    tpu.vector_store %arg7[%c0_23, %c0_24], %38 {strides = array<i32>} : memref<128x32xf32, #tpu.memory_space<vmem>>, vector<128x32xf32>,
    return
  }
  func.func @transform_0(%arg0: i32) -> (i32, i32) {
    %c0_i32 = arith.constant 0 : i32
    %c0_i32_0 = arith.constant 0 : i32
    return %arg0, %c0_i32 : i32, i32
  }
  func.func @transform_1(%arg0: i32) -> (i32, i32) {
    %c0_i32 = arith.constant 0 : i32
    %c0_i32_0 = arith.constant 0 : i32
    %c0_i32_1 = arith.constant 0 : i32
    return %c0_i32, %c0_i32_0 : i32, i32
  }
  func.func @transform_2(%arg0: i32) -> (i32, i32) {
    %c0_i32 = arith.constant 0 : i32
    %c0_i32_0 = arith.constant 0 : i32
    %c0_i32_1 = arith.constant 0 : i32
    return %c0_i32, %c0_i32_0 : i32, i32
  }
  func.func @transform_3(%arg0: i32) -> (i32, i32) {
    %c0_i32 = arith.constant 0 : i32
    %c0_i32_0 = arith.constant 0 : i32
    %c0_i32_1 = arith.constant 0 : i32
    return %c0_i32, %c0_i32_0 : i32, i32
  }
  func.func @transform_4(%arg0: i32) -> (i32, i32) {
    %c0_i32 = arith.constant 0 : i32
    %c0_i32_0 = arith.constant 0 : i32
    %c0_i32_1 = arith.constant 0 : i32
    return %c0_i32, %c0_i32_0 : i32, i32
  }
  func.func @transform_5(%arg0: i32) -> (i32, i32) {
    %c0_i32 = arith.constant 0 : i32
    %c0_i32_0 = arith.constant 0 : i32
    %c0_i32_1 = arith.constant 0 : i32
    return %c0_i32, %c0_i32_0 : i32, i32
  }
  func.func @transform_6(%arg0: i32) -> (i32, i32) {
    %c0_i32 = arith.constant 0 : i32
    %c0_i32_0 = arith.constant 0 : i32
    return %arg0, %c0_i32 : i32, i32
  }
  func.func @transform_7(%arg0: i32) -> (i32, i32) {
    %c0_i32 = arith.constant 0 : i32
    %c0_i32_0 = arith.constant 0 : i32
    return %arg0, %c0_i32 : i32, i32
  }
  func.func @transform_8(%arg0: i32) -> (i32, i32, i32) {
    %c0_i32 = arith.constant 0 : i32
    %c0_i32_0 = arith.constant 0 : i32
    %c0_i32_1 = arith.constant 0 : i32
    return %arg0, %c0_i32, %c0_i32_0 : i32, i32, i32
  }
}

</mosaic_0001>

<llo_original>
// kernel: tpu_custom_call.1
$region0: #{tpu_custom_call.1}
  #allocation0 [shape = 'u32[]', space=smem, size = 0x4, offset = 0x4, fixed_abs, tag = 'smem constant byte address 0x4 - core index']
  #allocation1 [shape = 'u32[72,128]{1,0:T(1,128)}', space=vmem, size = 0x9000, scoped, tag = 'internal scratch']
  %s0 = inlined_call_operand.vmem [shape: f32[128,32], index: 0, kind: input, shape index: {}]
  %s1 = inlined_call_operand.vmem [shape: f32[32,4], index: 1, kind: input, shape index: {}]
  %s2 = inlined_call_operand.vmem [shape: f32[1,4], index: 2, kind: input, shape index: {}]
  %s3 = inlined_call_operand.vmem [shape: f32[4,32], index: 3, kind: input, shape index: {}]
  %s4 = inlined_call_operand.vmem [shape: f32[1,32], index: 4, kind: input, shape index: {}]
  %s5 = inlined_call_operand.vmem [shape: f32[6,4], index: 5, kind: input, shape index: {}]
  %s6 = inlined_call_operand.vmem [shape: f32[128,32], index: 6, kind: output, shape index: {0}]
  %s7 = inlined_call_operand.vmem [shape: f32[128,4], index: 7, kind: output, shape index: {1}]
  %s8 = inlined_call_operand.hbm [shape: s32[1,1,128], index: 8, kind: output, shape index: {2}]
  %9 = xla_tuple %s6, %s7, %s8
  %s10 = sld [smem:[#allocation0]]
  $region50: #{tpu_custom_call.1} parent=0
    _
  %s12 = ssub.s32 1, %s10
  %s13 = scalar_select 0, %s12, %s10
  $region1: #{tpu_custom_call.1} parent=0
    #allocation2 [shape = 'u8[512]{0}', space=vmem, size = 0x400, scoped, tag = 'output window, operand 2, single buffered']
    #allocation3 [shape = 's32[1]{0}', space=sflag, size = 0x4, scoped, tag = 'scoped memory for tpu_custom_call.1']
    %14 = vsyncpa [#allocation3], 0
    // Predicated region
    $region2: #{tpu_custom_call.1} parent=1 // pred_check
      _
    $region3: #{tpu_custom_call.1} parent=1 // pred_check_branch
      %16 = sbr.rel (0) target = $region5
    $region4: #{tpu_custom_call.1} parent=1 // pred_region
      _
    $region5: #{tpu_custom_call.1} parent=1 // pred_fallthru
      _
    // Predicated region
    $region6: #{tpu_custom_call.1} parent=1 // pred_check
      _
    $region7: #{tpu_custom_call.1} parent=1 // pred_check_branch
      %18 = sbr.rel (0) target = $region9
    $region8: #{tpu_custom_call.1} parent=1 // pred_region
      _
    $region9: #{tpu_custom_call.1} parent=1 // pred_fallthru
      _
    // Predicated region
    $region10: #{tpu_custom_call.1} parent=1 // pred_check
      _
    $region11: #{tpu_custom_call.1} parent=1 // pred_check_branch
      %20 = sbr.rel (0) target = $region13
    $region12: #{tpu_custom_call.1} parent=1 // pred_region
      _
    $region13: #{tpu_custom_call.1} parent=1 // pred_fallthru
      _
    // Predicated region
    $region14: #{tpu_custom_call.1} parent=1 // pred_check
      _
    $region15: #{tpu_custom_call.1} parent=1 // pred_check_branch
      %22 = sbr.rel (0) target = $region17
    $region16: #{tpu_custom_call.1} parent=1 // pred_region
      _
    $region17: #{tpu_custom_call.1} parent=1 // pred_fallthru
      _
    // Predicated region
    $region18: #{tpu_custom_call.1} parent=1 // pred_check
      _
    $region19: #{tpu_custom_call.1} parent=1 // pred_check_branch
      %24 = sbr.rel (0) target = $region21
    $region20: #{tpu_custom_call.1} parent=1 // pred_region
      _
    $region21: #{tpu_custom_call.1} parent=1 // pred_fallthru
      _
    // Predicated region
    $region22: #{tpu_custom_call.1} parent=1 // pred_check
      _
    $region23: #{tpu_custom_call.1} parent=1 // pred_check_branch
      %26 = sbr.rel (0) target = $region25
    $region24: #{tpu_custom_call.1} parent=1 // pred_region
      _
    $region25: #{tpu_custom_call.1} parent=1 // pred_fallthru
      _
    %v27 = vld [vmem:[%s5] sm:$0x1]
    %v28 = vld [vmem:[%s5 + $0x1] sm:$0x1]
    %v29 = vld [vmem:[%s5 + $0x2] sm:$0x1]
    %v30 = vld [vmem:[%s5 + $0x3] sm:$0x1]
    %v31 = vld [vmem:[%s5 + $0x4] sm:$0x1]
    %v32 = vld [vmem:[%s5 + $0x5] sm:$0x1]
    %v33 = vld [vmem:[%s0] sm:$0xff]
    %v34 = vld [vmem:[%s0 + $0x8] sm:$0xff]
    %v35 = vld [vmem:[%s0 + $0x10] sm:$0xff]
    %v36 = vld [vmem:[%s0 + $0x18] sm:$0xff]
    %v37 = vld [vmem:[%s0 + $0x20] sm:$0xff]
    %v38 = vld [vmem:[%s0 + $0x28] sm:$0xff]
    %v39 = vld [vmem:[%s0 + $0x30] sm:$0xff]
    %v40 = vld [vmem:[%s0 + $0x38] sm:$0xff]
    %v41 = vld [vmem:[%s0 + $0x40] sm:$0xff]
    %v42 = vld [vmem:[%s0 + $0x48] sm:$0xff]
    %v43 = vld [vmem:[%s0 + $0x50] sm:$0xff]
    %v44 = vld [vmem:[%s0 + $0x58] sm:$0xff]
    %v45 = vld [vmem:[%s0 + $0x60] sm:$0xff]
    %v46 = vld [vmem:[%s0 + $0x68] sm:$0xff]
    %v47 = vld [vmem:[%s0 + $0x70] sm:$0xff]
    %v48 = vld [vmem:[%s0 + $0x78] sm:$0xff]
    %v49 = vld [vmem:[%s1] sm:$0xff]
    %v50 = vld [vmem:[%s1 + $0x8] sm:$0xff]
    %v51 = vld [vmem:[%s1 + $0x10] sm:$0xff]
    %v52 = vld [vmem:[%s1 + $0x18] sm:$0xff]
    %v53 = vld [vmem:[%s2] sm:$0x1]
    %v55 = vperm.slane %v53, 0
    %vm57 = vcmask 261120
    %v59 = vsel %vm57, %v33, 0
    %v62 = vsel %vm57, %v34, 0
    %v65 = vsel %vm57, %v35, 0
    %v68 = vsel %vm57, %v36, 0
    %v71 = vsel %vm57, %v37, 0
    %v74 = vsel %vm57, %v38, 0
    %v77 = vsel %vm57, %v39, 0
    %v80 = vsel %vm57, %v40, 0
    %v83 = vsel %vm57, %v41, 0
    %v86 = vsel %vm57, %v42, 0
    %v89 = vsel %vm57, %v43, 0
    %v92 = vsel %vm57, %v44, 0
    %v95 = vsel %vm57, %v45, 0
    %v98 = vsel %vm57, %v46, 0
    %v101 = vsel %vm57, %v47, 0
    %v104 = vsel %vm57, %v48, 0
    %106 = vmatpush.msra.mxu0 0.0
    %107 = vmatpush.msra.mxu0 0.0
    %108 = vmatpush.msra.mxu0 0.0
    %109 = vmatpush.msra.mxu0 0.0
    %110 = vmatpush.msra.mxu0 0.0
    %111 = vmatpush.msra.mxu0 0.0
    %112 = vmatpush.msra.mxu0 0.0
    %113 = vmatpush.msra.mxu0 0.0
    %114 = vmatpush.msra.mxu0 0.0
    %115 = vmatpush.msra.mxu0 0.0
    %116 = vmatpush.msra.mxu0 0.0
    %117 = vmatpush.msra.mxu0 0.0
    %118 = vmatpush.msra.mxu0 %v52
    %119 = vmatpush.msra.mxu0 %v51
    %120 = vmatpush.msra.mxu0 %v50
    %121 = vmatpush.msra.mxu0 %v49
    %122 = vmatmul.f32.gmra.mxu0 %v59
    %v123 = vpop.f32.mrf.mxu0
    %v124 = vadd.f32 %v55, %v123
    %125 = vmatmul.f32.gmra.mxu0 %v62
    %v126 = vpop.f32.mrf.mxu0
    %v127 = vadd.f32 %v55, %v126
    %128 = vmatmul.f32.gmra.mxu0 %v65
    %v129 = vpop.f32.mrf.mxu0
    %v130 = vadd.f32 %v55, %v129
    %131 = vmatmul.f32.gmra.mxu0 %v68
    %v132 = vpop.f32.mrf.mxu0
    %v133 = vadd.f32 %v55, %v132
    %134 = vmatmul.f32.gmra.mxu0 %v71
    %v135 = vpop.f32.mrf.mxu0
    %v136 = vadd.f32 %v55, %v135
    %137 = vmatmul.f32.gmra.mxu0 %v74
    %v138 = vpop.f32.mrf.mxu0
    %v139 = vadd.f32 %v55, %v138
    %140 = vmatmul.f32.gmra.mxu0 %v77
    %v141 = vpop.f32.mrf.mxu0
    %v142 = vadd.f32 %v55, %v141
    %143 = vmatmul.f32.gmra.mxu0 %v80
    %v144 = vpop.f32.mrf.mxu0
    %v145 = vadd.f32 %v55, %v144
    %146 = vmatmul.f32.gmra.mxu0 %v83
    %v147 = vpop.f32.mrf.mxu0
    %v148 = vadd.f32 %v55, %v147
    %149 = vmatmul.f32.gmra.mxu0 %v86
    %v150 = vpop.f32.mrf.mxu0
    %v151 = vadd.f32 %v55, %v150
    %152 = vmatmul.f32.gmra.mxu0 %v89
    %v153 = vpop.f32.mrf.mxu0
    %v154 = vadd.f32 %v55, %v153
    %155 = vmatmul.f32.gmra.mxu0 %v92
    %v156 = vpop.f32.mrf.mxu0
    %v157 = vadd.f32 %v55, %v156
    %158 = vmatmul.f32.gmra.mxu0 %v95
    %v159 = vpop.f32.mrf.mxu0
    %v160 = vadd.f32 %v55, %v159
    %161 = vmatmul.f32.gmra.mxu0 %v98
    %v162 = vpop.f32.mrf.mxu0
    %v163 = vadd.f32 %v55, %v162
    %164 = vmatmul.f32.gmra.mxu0 %v101
    %v165 = vpop.f32.mrf.mxu0
    %v166 = vadd.f32 %v55, %v165
    %167 = vmatmul.f32.gmra.mxu0 %v104
    %v168 = vpop.f32.mrf.mxu0
    %v169 = vadd.f32 %v55, %v168
    %170 = vdwg.mxu0
    %v171 = vperm.slane %v27, 0
    %v172 = vadd.f32 %v124, %v171
    %v173 = vadd.f32 %v127, %v171
    %v174 = vadd.f32 %v130, %v171
    %v175 = vadd.f32 %v133, %v171
    %v176 = vadd.f32 %v136, %v171
    %v177 = vadd.f32 %v139, %v171
    %v178 = vadd.f32 %v142, %v171
    %v179 = vadd.f32 %v145, %v171
    %v180 = vadd.f32 %v148, %v171
    %v181 = vadd.f32 %v151, %v171
    %v182 = vadd.f32 %v154, %v171
    %v183 = vadd.f32 %v157, %v171
    %v184 = vadd.f32 %v160, %v171
    %v185 = vadd.f32 %v163, %v171
    %v186 = vadd.f32 %v166, %v171
    %v187 = vadd.f32 %v169, %v171
    %v188 = vtanh.pop %v172
    %v189 = vtanh.pop %v173
    %v190 = vtanh.pop %v174
    %v191 = vtanh.pop %v175
    %v192 = vtanh.pop %v176
    %v193 = vtanh.pop %v177
    %v194 = vtanh.pop %v178
    %v195 = vtanh.pop %v179
    %v196 = vtanh.pop %v180
    %v197 = vtanh.pop %v181
    %v198 = vtanh.pop %v182
    %v199 = vtanh.pop %v183
    %v200 = vtanh.pop %v184
    %v201 = vtanh.pop %v185
    %v202 = vtanh.pop %v186
    %v203 = vtanh.pop %v187
    %v204 = vperm.slane %v28, 0
    %v205 = vmul.f32 %v188, %v204
    %v206 = vmul.f32 %v189, %v204
    %v207 = vmul.f32 %v190, %v204
    %v208 = vmul.f32 %v191, %v204
    %v209 = vmul.f32 %v192, %v204
    %v210 = vmul.f32 %v193, %v204
    %v211 = vmul.f32 %v194, %v204
    %v212 = vmul.f32 %v195, %v204
    %v213 = vmul.f32 %v196, %v204
    %v214 = vmul.f32 %v197, %v204
    %v215 = vmul.f32 %v198, %v204
    %v216 = vmul.f32 %v199, %v204
    %v217 = vmul.f32 %v200, %v204
    %v218 = vmul.f32 %v201, %v204
    %v219 = vmul.f32 %v202, %v204
    %v220 = vmul.f32 %v203, %v204
    %v221 = vperm.slane %v29, 0
    %v222 = vsub.f32 %v205, %v221
    %v223 = vsub.f32 %v206, %v221
    %v224 = vsub.f32 %v207, %v221
    %v225 = vsub.f32 %v208, %v221
    %v226 = vsub.f32 %v209, %v221
    %v227 = vsub.f32 %v210, %v221
    %v228 = vsub.f32 %v211, %v221
    %v229 = vsub.f32 %v212, %v221
    %v230 = vsub.f32 %v213, %v221
    %v231 = vsub.f32 %v214, %v221
    %v232 = vsub.f32 %v215, %v221
    %v233 = vsub.f32 %v216, %v221
    %v234 = vsub.f32 %v217, %v221
    %v235 = vsub.f32 %v218, %v221
    %v236 = vsub.f32 %v219, %v221
    %v237 = vsub.f32 %v220, %v221
    %v238 = vround.ne.pseudo %v222
    %v239 = vround.ne.pseudo %v223
    %v240 = vround.ne.pseudo %v224
    %v241 = vround.ne.pseudo %v225
    %v242 = vround.ne.pseudo %v226
    %v243 = vround.ne.pseudo %v227
    %v244 = vround.ne.pseudo %v228
    %v245 = vround.ne.pseudo %v229
    %v246 = vround.ne.pseudo %v230
    %v247 = vround.ne.pseudo %v231
    %v248 = vround.ne.pseudo %v232
    %v249 = vround.ne.pseudo %v233
    %v250 = vround.ne.pseudo %v234
    %v251 = vround.ne.pseudo %v235
    %v252 = vround.ne.pseudo %v236
    %v253 = vround.ne.pseudo %v237
    %v254 = vperm.slane %v30, 0
    %v255 = vmul.f32 %v238, %v254
    %v256 = vmul.f32 %v239, %v254
    %v257 = vmul.f32 %v240, %v254
    %v258 = vmul.f32 %v241, %v254
    %v259 = vmul.f32 %v242, %v254
    %v260 = vmul.f32 %v243, %v254
    %v261 = vmul.f32 %v244, %v254
    %v262 = vmul.f32 %v245, %v254
    %v263 = vmul.f32 %v246, %v254
    %v264 = vmul.f32 %v247, %v254
    %v265 = vmul.f32 %v248, %v254
    %v266 = vmul.f32 %v249, %v254
    %v267 = vmul.f32 %v250, %v254
    %v268 = vmul.f32 %v251, %v254
    %v269 = vmul.f32 %v252, %v254
    %v270 = vmul.f32 %v253, %v254
    %vm271 = vcmask 31744
    %272 = vst.msk [vmem:[%s7] sm:$0xff] %vm271, %v255
    %273 = vst.msk [vmem:[%s7 + $0x8] sm:$0xff] %vm271, %v256
    %274 = vst.msk [vmem:[%s7 + $0x10] sm:$0xff] %vm271, %v257
    %275 = vst.msk [vmem:[%s7 + $0x18] sm:$0xff] %vm271, %v258
    %276 = vst.msk [vmem:[%s7 + $0x20] sm:$0xff] %vm271, %v259
    %277 = vst.msk [vmem:[%s7 + $0x28] sm:$0xff] %vm271, %v260
    %278 = vst.msk [vmem:[%s7 + $0x30] sm:$0xff] %vm271, %v261
    %279 = vst.msk [vmem:[%s7 + $0x38] sm:$0xff] %vm271, %v262
    %280 = vst.msk [vmem:[%s7 + $0x40] sm:$0xff] %vm271, %v263
    %281 = vst.msk [vmem:[%s7 + $0x48] sm:$0xff] %vm271, %v264
    %282 = vst.msk [vmem:[%s7 + $0x50] sm:$0xff] %vm271, %v265
    %283 = vst.msk [vmem:[%s7 + $0x58] sm:$0xff] %vm271, %v266
    %284 = vst.msk [vmem:[%s7 + $0x60] sm:$0xff] %vm271, %v267
    %285 = vst.msk [vmem:[%s7 + $0x68] sm:$0xff] %vm271, %v268
    %286 = vst.msk [vmem:[%s7 + $0x70] sm:$0xff] %vm271, %v269
    %287 = vst.msk [vmem:[%s7 + $0x78] sm:$0xff] %vm271, %v270
    %v288 = vperm.slane %v31, 0
    %v289 = vadd.f32 %v238, %v288
    %v290 = vadd.f32 %v239, %v288
    %v291 = vadd.f32 %v240, %v288
    %v292 = vadd.f32 %v241, %v288
    %v293 = vadd.f32 %v242, %v288
    %v294 = vadd.f32 %v243, %v288
    %v295 = vadd.f32 %v244, %v288
    %v296 = vadd.f32 %v245, %v288
    %v297 = vadd.f32 %v246, %v288
    %v298 = vadd.f32 %v247, %v288
    %v299 = vadd.f32 %v248, %v288
    %v300 = vadd.f32 %v249, %v288
    %v301 = vadd.f32 %v250, %v288
    %v302 = vadd.f32 %v251, %v288
    %v303 = vadd.f32 %v252, %v288
    %v304 = vadd.f32 %v253, %v288
    %v305 = vperm.slane %v32, 0
    %v306 = vmul.f32 %v289, %v305
    %v307 = vmul.f32 %v290, %v305
    %v308 = vmul.f32 %v291, %v305
    %v309 = vmul.f32 %v292, %v305
    %v310 = vmul.f32 %v293, %v305
    %v311 = vmul.f32 %v294, %v305
    %v312 = vmul.f32 %v295, %v305
    %v313 = vmul.f32 %v296, %v305
    %v314 = vmul.f32 %v297, %v305
    %v315 = vmul.f32 %v298, %v305
    %v316 = vmul.f32 %v299, %v305
    %v317 = vmul.f32 %v300, %v305
    %v318 = vmul.f32 %v301, %v305
    %v319 = vmul.f32 %v302, %v305
    %v320 = vmul.f32 %v303, %v305
    %v321 = vmul.f32 %v304, %v305
    %v322 = vsel %vm271, %v306, 0.0
    %323 = vadd.xlane.f32.xlu0 %v322
    %v324 = vpop.xlane.xlu0 %323
    %v325 = vsel %vm271, %v307, 0.0
    %326 = vadd.xlane.f32.xlu0 %v325
    %v327 = vpop.xlane.xlu0 %326
    %v328 = vsel %vm271, %v308, 0.0
    %329 = vadd.xlane.f32.xlu0 %v328
    %v330 = vpop.xlane.xlu0 %329
    %v331 = vsel %vm271, %v309, 0.0
    %332 = vadd.xlane.f32.xlu0 %v331
    %v333 = vpop.xlane.xlu0 %332
    %v334 = vsel %vm271, %v310, 0.0
    %335 = vadd.xlane.f32.xlu0 %v334
    %v336 = vpop.xlane.xlu0 %335
    %v337 = vsel %vm271, %v311, 0.0
    %338 = vadd.xlane.f32.xlu0 %v337
    %v339 = vpop.xlane.xlu0 %338
    %v340 = vsel %vm271, %v312, 0.0
    %341 = vadd.xlane.f32.xlu0 %v340
    %v342 = vpop.xlane.xlu0 %341
    %v343 = vsel %vm271, %v313, 0.0
    %344 = vadd.xlane.f32.xlu0 %v343
    %v345 = vpop.xlane.xlu0 %344
    %v346 = vsel %vm271, %v314, 0.0
    %347 = vadd.xlane.f32.xlu0 %v346
    %v348 = vpop.xlane.xlu0 %347
    %v349 = vsel %vm271, %v315, 0.0
    %350 = vadd.xlane.f32.xlu0 %v349
    %v351 = vpop.xlane.xlu0 %350
    %v352 = vsel %vm271, %v316, 0.0
    %353 = vadd.xlane.f32.xlu0 %v352
    %v354 = vpop.xlane.xlu0 %353
    %v355 = vsel %vm271, %v317, 0.0
    %356 = vadd.xlane.f32.xlu0 %v355
    %v357 = vpop.xlane.xlu0 %356
    %v358 = vsel %vm271, %v318, 0.0
    %359 = vadd.xlane.f32.xlu0 %v358
    %v360 = vpop.xlane.xlu0 %359
    %v361 = vsel %vm271, %v319, 0.0
    %362 = vadd.xlane.f32.xlu0 %v361
    %v363 = vpop.xlane.xlu0 %362
    %v364 = vsel %vm271, %v320, 0.0
    %365 = vadd.xlane.f32.xlu0 %v364
    %v366 = vpop.xlane.xlu0 %365
    %v367 = vsel %vm271, %v321, 0.0
    %368 = vadd.xlane.f32.xlu0 %v367
    %v369 = vpop.xlane.xlu0 %368
    %v370 = vcvt.f32.s32.to.zero.pseudo %v324
    %v371 = vcvt.f32.s32.to.zero.pseudo %v327
    %v372 = vcvt.f32.s32.to.zero.pseudo %v330
    %v373 = vcvt.f32.s32.to.zero.pseudo %v333
    %v374 = vcvt.f32.s32.to.zero.pseudo %v336
    %v375 = vcvt.f32.s32.to.zero.pseudo %v339
    %v376 = vcvt.f32.s32.to.zero.pseudo %v342
    %v377 = vcvt.f32.s32.to.zero.pseudo %v345
    %v378 = vcvt.f32.s32.to.zero.pseudo %v348
    %v379 = vcvt.f32.s32.to.zero.pseudo %v351
    %v380 = vcvt.f32.s32.to.zero.pseudo %v354
    %v381 = vcvt.f32.s32.to.zero.pseudo %v357
    %v382 = vcvt.f32.s32.to.zero.pseudo %v360
    %v383 = vcvt.f32.s32.to.zero.pseudo %v363
    %v384 = vcvt.f32.s32.to.zero.pseudo %v366
    %v385 = vcvt.f32.s32.to.zero.pseudo %v369
    %v386 = vlaneseq
    %v387 = vand.u32 %v386, 127
    %v388 = vperm.slane %v370, %v387
    %v389 = vadd.s32 %v387, 4294967288
    %v390 = vperm.slane %v371, %v389
    %vm391 = vcmask 130112
    %v392 = vsel %vm391, %v390, %v388
    %v393 = vadd.s32 %v387, 4294967280
    %v394 = vperm.slane %v372, %v393
    %vm395 = vcmask 195712
    %v396 = vsel %vm395, %v394, %v392
    %v397 = vadd.s32 %v387, 4294967272
    %v398 = vperm.slane %v373, %v397
    %vm399 = vcmask 261312
    %v400 = vsel %vm399, %v398, %v396
    %v401 = vadd.s32 %v387, 4294967264
    %v402 = vperm.slane %v374, %v401
    %vm403 = vcmask 326912
    %v404 = vsel %vm403, %v402, %v400
    %v405 = vadd.s32 %v387, 4294967256
    %v406 = vperm.slane %v375, %v405
    %vm407 = vcmask 392512
    %v408 = vsel %vm407, %v406, %v404
    %v409 = vadd.s32 %v387, 4294967248
    %v410 = vperm.slane %v376, %v409
    %vm411 = vcmask 458112
    %v412 = vsel %vm411, %v410, %v408
    %v413 = vadd.s32 %v387, 4294967240
    %v414 = vperm.slane %v377, %v413
    %vm415 = vcmask 523712
    %v416 = vsel %vm415, %v414, %v412
    %v417 = vadd.s32 %v387, 4294967232
    %v418 = vperm.slane %v378, %v417
    %vm419 = vcmask 589312
    %v420 = vsel %vm419, %v418, %v416
    %v421 = vadd.s32 %v387, 4294967224
    %v422 = vperm.slane %v379, %v421
    %vm423 = vcmask 654912
    %v424 = vsel %vm423, %v422, %v420
    %v425 = vadd.s32 %v387, 4294967216
    %v426 = vperm.slane %v380, %v425
    %vm427 = vcmask 720512
    %v428 = vsel %vm427, %v426, %v424
    %v429 = vadd.s32 %v387, 4294967208
    %v430 = vperm.slane %v381, %v429
    %vm431 = vcmask 786112
    %v432 = vsel %vm431, %v430, %v428
    %v433 = vadd.s32 %v387, 4294967200
    %v434 = vperm.slane %v382, %v433
    %vm435 = vcmask 851712
    %v436 = vsel %vm435, %v434, %v432
    %v437 = vadd.s32 %v387, 4294967192
    %v438 = vperm.slane %v383, %v437
    %vm439 = vcmask 917312
    %v440 = vsel %vm439, %v438, %v436
    %v441 = vadd.s32 %v387, 4294967184
    %v442 = vperm.slane %v384, %v441
    %vm443 = vcmask 982912
    %v444 = vsel %vm443, %v442, %v440
    %v445 = vadd.s32 %v387, 4294967176
    %v446 = vperm.slane %v385, %v445
    %vm447 = vcmask 1048512
    %v448 = vsel %vm447, %v446, %v444
    %449 = vst [vmem:[#allocation2] sm:$0x1] %v448
    %v450 = vld [vmem:[%s3] sm:$0xf]
    %v451 = vld [vmem:[%s4] sm:$0x1]
    %v453 = vperm.slane %v451, 0
    %v456 = vsel %vm271, %v255, 0
    %v459 = vsel %vm271, %v256, 0
    %v462 = vsel %vm271, %v257, 0
    %v465 = vsel %vm271, %v258, 0
    %v468 = vsel %vm271, %v259, 0
    %v471 = vsel %vm271, %v260, 0
    %v474 = vsel %vm271, %v261, 0
    %v477 = vsel %vm271, %v262, 0
    %v480 = vsel %vm271, %v263, 0
    %v483 = vsel %vm271, %v264, 0
    %v486 = vsel %vm271, %v265, 0
    %v489 = vsel %vm271, %v266, 0
    %v492 = vsel %vm271, %v267, 0
    %v495 = vsel %vm271, %v268, 0
    %v498 = vsel %vm271, %v269, 0
    %v501 = vsel %vm271, %v270, 0
    %vm503 = vcmask 1043456
    %v505 = vsel %vm503, %v450, 0
    %507 = vmatpush.msra.mxu0 0.0
    %508 = vmatpush.msra.mxu0 0.0
    %509 = vmatpush.msra.mxu0 0.0
    %510 = vmatpush.msra.mxu0 0.0
    %511 = vmatpush.msra.mxu0 0.0
    %512 = vmatpush.msra.mxu0 0.0
    %513 = vmatpush.msra.mxu0 0.0
    %514 = vmatpush.msra.mxu0 0.0
    %515 = vmatpush.msra.mxu0 0.0
    %516 = vmatpush.msra.mxu0 0.0
    %517 = vmatpush.msra.mxu0 0.0
    %518 = vmatpush.msra.mxu0 0.0
    %519 = vmatpush.msra.mxu0 0.0
    %520 = vmatpush.msra.mxu0 0.0
    %521 = vmatpush.msra.mxu0 0.0
    %522 = vmatpush.msra.mxu0 %v505
    %523 = vmatmul.f32.gmra.mxu0 %v456
    %v524 = vpop.f32.mrf.mxu0
    %v525 = vadd.f32 %v453, %v524
    %526 = vmatmul.f32.gmra.mxu0 %v459
    %v527 = vpop.f32.mrf.mxu0
    %v528 = vadd.f32 %v453, %v527
    %529 = vmatmul.f32.gmra.mxu0 %v462
    %v530 = vpop.f32.mrf.mxu0
    %v531 = vadd.f32 %v453, %v530
    %532 = vmatmul.f32.gmra.mxu0 %v465
    %v533 = vpop.f32.mrf.mxu0
    %v534 = vadd.f32 %v453, %v533
    %535 = vmatmul.f32.gmra.mxu0 %v468
    %v536 = vpop.f32.mrf.mxu0
    %v537 = vadd.f32 %v453, %v536
    %538 = vmatmul.f32.gmra.mxu0 %v471
    %v539 = vpop.f32.mrf.mxu0
    %v540 = vadd.f32 %v453, %v539
    %541 = vmatmul.f32.gmra.mxu0 %v474
    %v542 = vpop.f32.mrf.mxu0
    %v543 = vadd.f32 %v453, %v542
    %544 = vmatmul.f32.gmra.mxu0 %v477
    %v545 = vpop.f32.mrf.mxu0
    %v546 = vadd.f32 %v453, %v545
    %547 = vmatmul.f32.gmra.mxu0 %v480
    %v548 = vpop.f32.mrf.mxu0
    %v549 = vadd.f32 %v453, %v548
    %550 = vmatmul.f32.gmra.mxu0 %v483
    %v551 = vpop.f32.mrf.mxu0
    %v552 = vadd.f32 %v453, %v551
    %553 = vmatmul.f32.gmra.mxu0 %v486
    %v554 = vpop.f32.mrf.mxu0
    %v555 = vadd.f32 %v453, %v554
    %556 = vmatmul.f32.gmra.mxu0 %v489
    %v557 = vpop.f32.mrf.mxu0
    %v558 = vadd.f32 %v453, %v557
    %559 = vmatmul.f32.gmra.mxu0 %v492
    %v560 = vpop.f32.mrf.mxu0
    %v561 = vadd.f32 %v453, %v560
    %562 = vmatmul.f32.gmra.mxu0 %v495
    %v563 = vpop.f32.mrf.mxu0
    %v564 = vadd.f32 %v453, %v563
    %565 = vmatmul.f32.gmra.mxu0 %v498
    %v566 = vpop.f32.mrf.mxu0
    %v567 = vadd.f32 %v453, %v566
    %568 = vmatmul.f32.gmra.mxu0 %v501
    %v569 = vpop.f32.mrf.mxu0
    %v570 = vadd.f32 %v453, %v569
    %571 = vdwg.mxu0
    %572 = vst.msk [vmem:[%s6] sm:$0xff] %vm57, %v525
    %573 = vst.msk [vmem:[%s6 + $0x8] sm:$0xff] %vm57, %v528
    %574 = vst.msk [vmem:[%s6 + $0x10] sm:$0xff] %vm57, %v531
    %575 = vst.msk [vmem:[%s6 + $0x18] sm:$0xff] %vm57, %v534
    %576 = vst.msk [vmem:[%s6 + $0x20] sm:$0xff] %vm57, %v537
    %577 = vst.msk [vmem:[%s6 + $0x28] sm:$0xff] %vm57, %v540
    %578 = vst.msk [vmem:[%s6 + $0x30] sm:$0xff] %vm57, %v543
    %579 = vst.msk [vmem:[%s6 + $0x38] sm:$0xff] %vm57, %v546
    %580 = vst.msk [vmem:[%s6 + $0x40] sm:$0xff] %vm57, %v549
    %581 = vst.msk [vmem:[%s6 + $0x48] sm:$0xff] %vm57, %v552
    %582 = vst.msk [vmem:[%s6 + $0x50] sm:$0xff] %vm57, %v555
    %583 = vst.msk [vmem:[%s6 + $0x58] sm:$0xff] %vm57, %v558
    %584 = vst.msk [vmem:[%s6 + $0x60] sm:$0xff] %vm57, %v561
    %585 = vst.msk [vmem:[%s6 + $0x68] sm:$0xff] %vm57, %v564
    %586 = vst.msk [vmem:[%s6 + $0x70] sm:$0xff] %vm57, %v567
    %587 = vst.msk [vmem:[%s6 + $0x78] sm:$0xff] %vm57, %v570
    // Predicated region
    $region26: #{tpu_custom_call.1} parent=1 // pred_check
      _
    $region27: #{tpu_custom_call.1} parent=1 // pred_check_branch
      %589 = sbr.rel (0) target = $region29
    $region28: #{tpu_custom_call.1} parent=1 // pred_region
      _
    $region29: #{tpu_custom_call.1} parent=1 // pred_fallthru
      _
    // Predicated region
    $region30: #{tpu_custom_call.1} parent=1 // pred_check
      _
    $region31: #{tpu_custom_call.1} parent=1 // pred_check_branch
      %591 = sbr.rel (0) target = $region33
    $region32: #{tpu_custom_call.1} parent=1 // pred_region
      _
    $region33: #{tpu_custom_call.1} parent=1 // pred_fallthru
      _
    // Predicated region
    $region34: #{tpu_custom_call.1} parent=1 // pred_check
      _
    $region35: #{tpu_custom_call.1} parent=1 // pred_check_branch
      %593 = sbr.rel (0) target = $region37
    $region36: #{tpu_custom_call.1} parent=1 // pred_region
      %595 = vsyncadd [#allocation3], 0
      %s597 = sshll.u32 [#allocation2], 4
      %s598 = int_to_ptr.vmem [resolvable:$true] %s597
      %s599 = sshll.u32 %s8, 4
      %s600 = int_to_ptr.hbm [resolvable:$true] %s599
      %602 = dma.vmem_to_hbm [thread:$0]  %s598, 16, %s600, [#allocation3]
    $region37: #{tpu_custom_call.1} parent=1 // pred_fallthru
      _
    // Predicated region
    $region38: #{tpu_custom_call.1} parent=1 // pred_check
      _
    $region39: #{tpu_custom_call.1} parent=1 // pred_check_branch
      %604 = sbr.rel (0) target = $region41
    $region40: #{tpu_custom_call.1} parent=1 // pred_region
      _
    $region41: #{tpu_custom_call.1} parent=1 // pred_fallthru
      _
    // Predicated region
    $region42: #{tpu_custom_call.1} parent=1 // pred_check
      _
    $region43: #{tpu_custom_call.1} parent=1 // pred_check_branch
      %606 = sbr.rel (0) target = $region45
    $region44: #{tpu_custom_call.1} parent=1 // pred_region
      _
    $region45: #{tpu_custom_call.1} parent=1 // pred_fallthru
      _
    // Predicated region
    $region46: #{tpu_custom_call.1} parent=1 // pred_check
      _
    $region47: #{tpu_custom_call.1} parent=1 // pred_check_branch
      %608 = sbr.rel (0) target = $region49
    $region48: #{tpu_custom_call.1} parent=1 // pred_region
      %610 = dma.done [#allocation3], 16
    $region49: #{tpu_custom_call.1} parent=1 // pred_fallthru
      _
    %611 = vsyncpa [#allocation3], 1

</llo_original>
